<compile_context>
chip_gen: v6e
topology: v6e:2x2x1
jax: 0.10.0
libtpu: 0.0.40
codegen_flags: <defaults>
</compile_context>

<pallas_src>
import functools

import jax
import jax.numpy as jnp
from jax.experimental import pallas as pl
from jax.experimental.pallas import tpu as pltpu

H = 32            # lstm_encoder_size
RELU_PARAM = 0.1  # LeakyReLU negative slope (args['relu'])
USE_ELU = False   # args['use_elu']
LN_EPS = 1e-5


# ---------------------------------------------------------------------------
# Chip detection (host-side, one time).  bf16 EUP path only on v6e/v7x;
# dual-TC (megacore) grid shaping only on v7x.
# ---------------------------------------------------------------------------
def _detect_chip():
    try:
        kind = jax.devices()[0].device_kind.lower()
    except Exception:  # pragma: no cover - non-TPU fallback
        kind = ""
    dual_tc = "v7" in kind
    bf16_eup = ("v6" in kind) or ("v7" in kind)
    return dual_tc, bf16_eup


# ---------------------------------------------------------------------------
# Kernel
# ---------------------------------------------------------------------------
def _decoder_kernel(x_ref,
                    w0_ref, b0_ref,
                    w1_ref, b1_ref,
                    w2_ref, b2_ref,
                    w3_ref, b3_ref,
                    gamma_ref, beta_ref,
                    out_ref,
                    *, tanh_bf16):
    def _tanh(v):
        if tanh_bf16:
            # v6e/v7x: bf16-capable EUP -> ~2x throughput on the binding unit.
            return jnp.tanh(v.astype(jnp.bfloat16)).astype(jnp.float32)
        return jnp.tanh(v)

    x = x_ref[...].astype(jnp.float32)                         # (TM, H)

    # states1 = tanh(project0(x)),  project0: H -> 2H   (pre-transposed (H, 2H))
    s1 = _tanh(
        jnp.dot(x, w0_ref[...], preferred_element_type=jnp.float32)
        + b0_ref[...])                                          # (TM, 2H)

    # states2 = tanh(project1(states1)),  project1: 2H -> H   ((2H, H))
    s2 = _tanh(
        jnp.dot(s1, w1_ref[...], preferred_element_type=jnp.float32)
        + b1_ref[...])                                          # (TM, H)

    # AddAndNorm: LayerNorm(x + states2) over the last dim.
    # One-pass statistics: var = E[z^2] - mean^2 (single fused reduction pass).
    z = x + s2
    mean = jnp.mean(z, axis=-1, keepdims=True)
    mean_sq = jnp.mean(z * z, axis=-1, keepdims=True)
    var = jnp.maximum(mean_sq - mean * mean, 0.0)
    zn = (z - mean) * jax.lax.rsqrt(var + LN_EPS)
    s2n = zn * gamma_ref[...] + beta_ref[...]                   # (TM, H)

    # states3 = activation(project2(states2n)),  project2: H -> H   ((H, H))
    p2 = (jnp.dot(s2n, w2_ref[...], preferred_element_type=jnp.float32)
          + b2_ref[...])                                        # (TM, H)
    if USE_ELU:
        s3 = jnp.where(p2 > 0, p2, jnp.expm1(p2))
    else:
        s3 = jnp.where(p2 > 0, p2, RELU_PARAM * p2)

    # y = project3(states3),  project3: H -> 3   ((H, 3))
    y = (jnp.dot(s3, w3_ref[...], preferred_element_type=jnp.float32)
         + b3_ref[...])                                         # (TM, 3)

    # Output width 3 uses masked stores; bytes are tiny so we keep it.
    # Profile-gated alternative: emit (3, TM) lane-dense tiles and transpose
    # in the wrapper if writeback ever shows exposed.
    out_ref[...] = y.astype(out_ref.dtype)


# ---------------------------------------------------------------------------
# Tile selection (generation-aware)
# ---------------------------------------------------------------------------
def _pick_tile_m(N, *, dual_tc, cap=8192, small_n=2048):
    """Row-tile size.

    * Small N or single-TC chips: one full tile (grid=1) -> no per-step overhead.
    * Dual-TC (v7x): largest divisor of N that is a multiple of 8, <= cap, and
      gives an EVEN step count so the 'parallel' grid axis splits evenly across
      both TensorCores.
    """
    if N <= small_n:
        return N                                   # single tile, grid=(1,)
    if not dual_tc and N <= cap:
        return N                                   # single tile on 1-TC chips

    best = None
    limit = min(N, cap)
    for tm in range(8, limit + 1, 8):
        if N % tm:
            continue
        steps = N // tm
        if dual_tc and steps < 2:
            continue
        if dual_tc and steps % 2 != 0:
            continue
        best = tm
    if best is None:
        # Relax the even-steps preference.
        for tm in range(8, limit + 1, 8):
            if N % tm == 0:
                best = tm
    if best is None:
        best = N                                   # full-extent tile always legal
    return best


# ---------------------------------------------------------------------------
# Wrapper
# ---------------------------------------------------------------------------
def decoder_forward(x2d, params, *, tile_m=None, tanh_bf16=None):
    """x2d: (N, H) float32.  params: kernel-layout params (see prepare_params).
    Returns (N, 3)."""
    N, Hin = x2d.shape
    assert Hin == H

    dual_tc, bf16_eup = _detect_chip()
    if tanh_bf16 is None:
        tanh_bf16 = bf16_eup
    if tile_m is None:
        tile_m = _pick_tile_m(N, dual_tc=dual_tc)
    assert N % tile_m == 0
    assert tile_m % 8 == 0 or tile_m == N, "tile_m must be a multiple of 8 (or full N)"

    (w0t, b0, w1t, b1, w2t, b2, w3t, b3, gamma, beta) = params

    def full(shape):
        return pl.BlockSpec(shape, lambda i, _s=len(shape): tuple(0 for _ in range(_s)))

    # Advisory cost estimate for XLA scheduling around the custom call.
    flops_per_row = 2 * (H * 2 * H + 2 * H * H + H * H + H * 3)
    weight_bytes = 4 * (H * 2 * H + 2 * H * H + H * H + H * 3 + 2 * H + H + H + 3 + 2 * H)
    cost = pl.CostEstimate(
        flops=int(flops_per_row * N),
        transcendentals=int(3 * H * N),                 # 96 tanh per row
        bytes_accessed=int(N * (4 * H + 4 * 3) + weight_bytes),
    )

    kernel = functools.partial(_decoder_kernel, tanh_bf16=bool(tanh_bf16))

    return pl.pallas_call(
        kernel,
        out_shape=jax.ShapeDtypeStruct((N, 3), jnp.float32),
        grid_spec=pltpu.PrefetchScalarGridSpec(
            num_scalar_prefetch=0,
            grid=(N // tile_m,),
            in_specs=[
                pl.BlockSpec((tile_m, H), lambda i: (i, 0)),   # x (row-tiled)
                full(w0t.shape), full(b0.shape),
                full(w1t.shape), full(b1.shape),
                full(w2t.shape), full(b2.shape),
                full(w3t.shape), full(b3.shape),
                full(gamma.shape), full(beta.shape),
            ],
            out_specs=pl.BlockSpec((tile_m, 3), lambda i: (i, 0)),
        ),
        compiler_params=pltpu.CompilerParams(
            dimension_semantics=("parallel",)),   # rows independent -> megacore on v7x
        cost_estimate=cost,
    )(x2d, w0t, b0, w1t, b1, w2t, b2, w3t, b3, gamma, beta)


# ---------------------------------------------------------------------------
# Parameters (PyTorch layout) + one-time kernel-layout conversion + reference
# ---------------------------------------------------------------------------
def make_params(key):
    """Deterministic synthetic parameters in PyTorch layout: W is (out_f, in_f)."""
    ks = jax.random.split(key, 8)

    def linear(kw, kb, out_f, in_f):
        bound = 1.0 / (in_f ** 0.5)
        w = jax.random.uniform(kw, (out_f, in_f), jnp.float32, -bound, bound)
        b = jax.random.uniform(kb, (out_f,), jnp.float32, -bound, bound)
        return w, b

    w0, b0 = linear(ks[0], ks[1], 2 * H, H)       # project0
    w1, b1 = linear(ks[2], ks[3], H, 2 * H)       # project1
    w2, b2 = linear(ks[4], ks[5], H, H)           # project2
    w3, b3 = linear(ks[6], ks[7], 3, H)           # project3
    gamma = jnp.ones((H,), jnp.float32)           # LayerNorm weight
    beta = jnp.zeros((H,), jnp.float32)           # LayerNorm bias
    return (w0, b0, w1, b1, w2, b2, w3, b3, gamma, beta)


def prepare_params(pt_params):
    """One-time conversion to kernel layout:
       * weights transposed to (in_f, out_f)   -> no in-kernel .T / XLU work
       * biases / gamma / beta reshaped to (1, out_f) 2-D sublane-broadcastable refs
    """
    (w0, b0, w1, b1, w2, b2, w3, b3, gamma, beta) = pt_params
    r = lambda v: v.reshape(1, -1)
    return (w0.T, r(b0), w1.T, r(b1), w2.T, r(b2), w3.T, r(b3), r(gamma), r(beta))


def reference_forward(x2d, pt_params):
    """Pure-JAX reference (PyTorch-layout params, f32 tanh) for sanity checking."""
    (w0, b0, w1, b1, w2, b2, w3, b3, gamma, beta) = pt_params
    s1 = jnp.tanh(x2d @ w0.T + b0)
    s2 = jnp.tanh(s1 @ w1.T + b1)
    z = x2d + s2
    mean = jnp.mean(z, axis=-1, keepdims=True)
    var = jnp.mean((z - mean) ** 2, axis=-1, keepdims=True)
    s2n = (z - mean) / jnp.sqrt(var + LN_EPS) * gamma + beta
    p2 = s2n @ w2.T + b2
    if USE_ELU:
        s3 = jnp.where(p2 > 0, p2, jnp.expm1(p2))
    else:
        s3 = jnp.where(p2 > 0, p2, RELU_PARAM * p2)
    return s3 @ w3.T + b3


if __name__ == "__main__":
    key = jax.random.PRNGKey(0)
    kp, kx = jax.random.split(key)
    pt_params = make_params(kp)           # PyTorch-layout (out, in) weights
    params = prepare_params(pt_params)    # kernel-layout: pre-transposed, 2-D biases

    batch, seq = 2, 8
    x = jax.random.normal(kx, (batch, seq, H), jnp.float32)   # (2, 8, 32)
    x2d = x.reshape(-1, H)                                     # (16, 32)

    _, bf16_eup = _detect_chip()

    y2d = decoder_forward(x2d, params)     # N=16 -> single full tile, grid=(1,)
    y = y2d.reshape(batch, seq, 3)
    jax.block_until_ready(y)

    y_ref = reference_forward(x2d, pt_params).reshape(batch, seq, 3)
    # Parity: tight vs the f32 reference unless the bf16-tanh fast path is active
    # (v6e/v7x), in which case the documented looser tolerance applies.
    tol = 5e-2 if bf16_eup else 1e-4
    assert jnp.allclose(y, y_ref, atol=tol, rtol=tol), "mismatch vs reference"

    # TODO(synk): nn.Dropout is treated as identity (inference/eval mode only).
    print("KERNEL_OK")
</pallas_src>

<mosaic_0001>
module attributes {stable_mosaic.version = 11 : i64} {
  func.func @_decoder_kernel(%arg0: i32, %arg1: memref<16x32xf32, #tpu.memory_space<vmem>>, %arg2: memref<32x64xf32, #tpu.memory_space<vmem>>, %arg3: memref<1x64xf32, #tpu.memory_space<vmem>>, %arg4: memref<64x32xf32, #tpu.memory_space<vmem>>, %arg5: memref<1x32xf32, #tpu.memory_space<vmem>>, %arg6: memref<32x32xf32, #tpu.memory_space<vmem>>, %arg7: memref<1x32xf32, #tpu.memory_space<vmem>>, %arg8: memref<32x3xf32, #tpu.memory_space<vmem>>, %arg9: memref<1x3xf32, #tpu.memory_space<vmem>>, %arg10: memref<1x32xf32, #tpu.memory_space<vmem>>, %arg11: memref<1x32xf32, #tpu.memory_space<vmem>>, %arg12: memref<16x3xf32, #tpu.memory_space<vmem>>) attributes {dimension_semantics = [#tpu.dimension_semantics<parallel>], iteration_bounds = array<i64: 1>, scalar_prefetch = 0 : i64, scratch_operands = 0 : i64, tpu.core_type = #tpu.core_type<tc>, window_params = [{transform_indices = @transform_0, window_bounds = array<i64: 16, 32>}, {pipeline_mode = #tpu.pipeline_mode<synchronous>, transform_indices = @transform_1, window_bounds = array<i64: 32, 64>}, {pipeline_mode = #tpu.pipeline_mode<synchronous>, transform_indices = @transform_2, window_bounds = array<i64: 1, 64>}, {pipeline_mode = #tpu.pipeline_mode<synchronous>, transform_indices = @transform_3, window_bounds = array<i64: 64, 32>}, {pipeline_mode = #tpu.pipeline_mode<synchronous>, transform_indices = @transform_4, window_bounds = array<i64: 1, 32>}, {pipeline_mode = #tpu.pipeline_mode<synchronous>, transform_indices = @transform_5, window_bounds = array<i64: 32, 32>}, {pipeline_mode = #tpu.pipeline_mode<synchronous>, transform_indices = @transform_6, window_bounds = array<i64: 1, 32>}, {pipeline_mode = #tpu.pipeline_mode<synchronous>, transform_indices = @transform_7, window_bounds = array<i64: 32, 3>}, {pipeline_mode = #tpu.pipeline_mode<synchronous>, transform_indices = @transform_8, window_bounds = array<i64: 1, 3>}, {pipeline_mode = #tpu.pipeline_mode<synchronous>, transform_indices = @transform_9, window_bounds = array<i64: 1, 32>}, {pipeline_mode = #tpu.pipeline_mode<synchronous>, transform_indices = @transform_10, window_bounds = array<i64: 1, 32>}, {transform_indices = @transform_11, window_bounds = array<i64: 16, 3>}]} {
    %c0 = arith.constant 0 : index
    %c0_0 = arith.constant 0 : index
    %0 = vector.load %arg1[%c0, %c0_0] : memref<16x32xf32, #tpu.memory_space<vmem>>, vector<16x32xf32>
    %c0_1 = arith.constant 0 : index
    %c0_2 = arith.constant 0 : index
    %1 = vector.load %arg2[%c0_1, %c0_2] : memref<32x64xf32, #tpu.memory_space<vmem>>, vector<32x64xf32>
    %cst = arith.constant dense<0.000000e+00> : vector<16x64xf32>
    %2 = tpu.matmul %0, %1, %cst {dimension_numbers = #tpu.dot_dimension_numbers<[1], [0], [0], [1], [0, 0, 1, 1], [], []>} : vector<16x32xf32>, vector<32x64xf32>, vector<16x64xf32> -> vector<16x64xf32>
    %c0_3 = arith.constant 0 : index
    %c0_4 = arith.constant 0 : index
    %3 = vector.load %arg3[%c0_3, %c0_4] : memref<1x64xf32, #tpu.memory_space<vmem>>, vector<1x64xf32>
    %4 = vector.broadcast %3 : vector<1x64xf32> to vector<16x64xf32>
    %5 = arith.addf %2, %4 : vector<16x64xf32>
    %6 = math.tanh %5 : vector<16x64xf32>
    %c0_5 = arith.constant 0 : index
    %c0_6 = arith.constant 0 : index
    %7 = vector.load %arg4[%c0_5, %c0_6] : memref<64x32xf32, #tpu.memory_space<vmem>>, vector<64x32xf32>
    %cst_7 = arith.constant dense<0.000000e+00> : vector<16x32xf32>
    %8 = tpu.matmul %6, %7, %cst_7 {dimension_numbers = #tpu.dot_dimension_numbers<[1], [0], [0], [1], [0, 0, 1, 1], [], []>} : vector<16x64xf32>, vector<64x32xf32>, vector<16x32xf32> -> vector<16x32xf32>
    %c0_8 = arith.constant 0 : index
    %c0_9 = arith.constant 0 : index
    %9 = vector.load %arg5[%c0_8, %c0_9] : memref<1x32xf32, #tpu.memory_space<vmem>>, vector<1x32xf32>
    %10 = vector.broadcast %9 : vector<1x32xf32> to vector<16x32xf32>
    %11 = arith.addf %8, %10 : vector<16x32xf32>
    %12 = math.tanh %11 : vector<16x32xf32>
    %13 = arith.addf %0, %12 : vector<16x32xf32>
    %cst_10 = arith.constant dense<0.000000e+00> : vector<16xf32>
    %14 = vector.multi_reduction <add>, %13, %cst_10 [1] : vector<16x32xf32> to vector<16xf32>
    %15 = vector.shape_cast %14 : vector<16xf32> to vector<16x1xf32>
    %cst_11 = arith.constant 3.200000e+01 : f32
    %16 = vector.broadcast %cst_11 : f32 to vector<16x1xf32>
    %17 = arith.divf %15, %16 : vector<16x1xf32>
    %18 = arith.mulf %13, %13 : vector<16x32xf32>
    %cst_12 = arith.constant dense<0.000000e+00> : vector<16xf32>
    %19 = vector.multi_reduction <add>, %18, %cst_12 [1] : vector<16x32xf32> to vector<16xf32>
    %20 = vector.shape_cast %19 : vector<16xf32> to vector<16x1xf32>
    %cst_13 = arith.constant 3.200000e+01 : f32
    %21 = vector.broadcast %cst_13 : f32 to vector<16x1xf32>
    %22 = arith.divf %20, %21 : vector<16x1xf32>
    %23 = arith.mulf %17, %17 : vector<16x1xf32>
    %24 = arith.subf %22, %23 : vector<16x1xf32>
    %cst_14 = arith.constant 0.000000e+00 : f32
    %25 = vector.broadcast %cst_14 : f32 to vector<16x1xf32>
    %26 = arith.maximumf %24, %25 : vector<16x1xf32>
    %27 = vector.broadcast %17 : vector<16x1xf32> to vector<16x32xf32>
    %28 = arith.subf %13, %27 : vector<16x32xf32>
    %cst_15 = arith.constant 9.99999974E-6 : f32
    %29 = vector.broadcast %cst_15 : f32 to vector<16x1xf32>
    %30 = arith.addf %26, %29 : vector<16x1xf32>
    %31 = math.rsqrt %30 : vector<16x1xf32>
    %32 = vector.broadcast %31 : vector<16x1xf32> to vector<16x32xf32>
    %33 = arith.mulf %28, %32 : vector<16x32xf32>
    %c0_16 = arith.constant 0 : index
    %c0_17 = arith.constant 0 : index
    %34 = vector.load %arg10[%c0_16, %c0_17] : memref<1x32xf32, #tpu.memory_space<vmem>>, vector<1x32xf32>
    %35 = vector.broadcast %34 : vector<1x32xf32> to vector<16x32xf32>
    %36 = arith.mulf %33, %35 : vector<16x32xf32>
    %c0_18 = arith.constant 0 : index
    %c0_19 = arith.constant 0 : index
    %37 = vector.load %arg11[%c0_18, %c0_19] : memref<1x32xf32, #tpu.memory_space<vmem>>, vector<1x32xf32>
    %38 = vector.broadcast %37 : vector<1x32xf32> to vector<16x32xf32>
    %39 = arith.addf %36, %38 : vector<16x32xf32>
    %c0_20 = arith.constant 0 : index
    %c0_21 = arith.constant 0 : index
    %40 = vector.load %arg6[%c0_20, %c0_21] : memref<32x32xf32, #tpu.memory_space<vmem>>, vector<32x32xf32>
    %cst_22 = arith.constant dense<0.000000e+00> : vector<16x32xf32>
    %41 = tpu.matmul %39, %40, %cst_22 {dimension_numbers = #tpu.dot_dimension_numbers<[1], [0], [0], [1], [0, 0, 1, 1], [], []>} : vector<16x32xf32>, vector<32x32xf32>, vector<16x32xf32> -> vector<16x32xf32>
    %c0_23 = arith.constant 0 : index
    %c0_24 = arith.constant 0 : index
    %42 = vector.load %arg7[%c0_23, %c0_24] : memref<1x32xf32, #tpu.memory_space<vmem>>, vector<1x32xf32>
    %43 = vector.broadcast %42 : vector<1x32xf32> to vector<16x32xf32>
    %44 = arith.addf %41, %43 : vector<16x32xf32>
    %cst_25 = arith.constant 0.000000e+00 : f32
    %45 = vector.broadcast %cst_25 : f32 to vector<16x32xf32>
    %46 = arith.cmpf ogt, %44, %45 : vector<16x32xf32>
    %cst_26 = arith.constant 1.000000e-01 : f32
    %47 = vector.broadcast %cst_26 : f32 to vector<16x32xf32>
    %48 = arith.mulf %47, %44 : vector<16x32xf32>
    %49 = arith.select %46, %44, %48 : vector<16x32xi1>, vector<16x32xf32>
    %c0_27 = arith.constant 0 : index
    %c0_28 = arith.constant 0 : index
    %50 = vector.load %arg8[%c0_27, %c0_28] : memref<32x3xf32, #tpu.memory_space<vmem>>, vector<32x3xf32>
    %cst_29 = arith.constant dense<0.000000e+00> : vector<16x3xf32>
    %51 = tpu.matmul %49, %50, %cst_29 {dimension_numbers = #tpu.dot_dimension_numbers<[1], [0], [0], [1], [0, 0, 1, 1], [], []>} : vector<16x32xf32>, vector<32x3xf32>, vector<16x3xf32> -> vector<16x3xf32>
    %c0_30 = arith.constant 0 : index
    %c0_31 = arith.constant 0 : index
    %52 = vector.load %arg9[%c0_30, %c0_31] : memref<1x3xf32, #tpu.memory_space<vmem>>, vector<1x3xf32>
    %53 = vector.broadcast %52 : vector<1x3xf32> to vector<16x3xf32>
    %54 = arith.addf %51, %53 : vector<16x3xf32>
    %c0_32 = arith.constant 0 : index
    %c0_33 = arith.constant 0 : index
    %55 = vector.load %arg12[%c0_32, %c0_33] : memref<16x3xf32, #tpu.memory_space<vmem>>, vector<16x3xf32>
    tpu.vector_store %arg12[%c0_32, %c0_33], %54 {strides = array<i32>} : memref<16x3xf32, #tpu.memory_space<vmem>>, vector<16x3xf32>,
    return
  }
  func.func @transform_0(%arg0: i32) -> (i32, i32) {
    %c0_i32 = arith.constant 0 : i32
    %c0_i32_0 = arith.constant 0 : i32
    return %arg0, %c0_i32 : i32, i32
  }
  func.func @transform_1(%arg0: i32) -> (i32, i32) {
    %c0_i32 = arith.constant 0 : i32
    %c0_i32_0 = arith.constant 0 : i32
    %c0_i32_1 = arith.constant 0 : i32
    return %c0_i32, %c0_i32_0 : i32, i32
  }
  func.func @transform_2(%arg0: i32) -> (i32, i32) {
    %c0_i32 = arith.constant 0 : i32
    %c0_i32_0 = arith.constant 0 : i32
    %c0_i32_1 = arith.constant 0 : i32
    return %c0_i32, %c0_i32_0 : i32, i32
  }
  func.func @transform_3(%arg0: i32) -> (i32, i32) {
    %c0_i32 = arith.constant 0 : i32
    %c0_i32_0 = arith.constant 0 : i32
    %c0_i32_1 = arith.constant 0 : i32
    return %c0_i32, %c0_i32_0 : i32, i32
  }
  func.func @transform_4(%arg0: i32) -> (i32, i32) {
    %c0_i32 = arith.constant 0 : i32
    %c0_i32_0 = arith.constant 0 : i32
    %c0_i32_1 = arith.constant 0 : i32
    return %c0_i32, %c0_i32_0 : i32, i32
  }
  func.func @transform_5(%arg0: i32) -> (i32, i32) {
    %c0_i32 = arith.constant 0 : i32
    %c0_i32_0 = arith.constant 0 : i32
    %c0_i32_1 = arith.constant 0 : i32
    return %c0_i32, %c0_i32_0 : i32, i32
  }
  func.func @transform_6(%arg0: i32) -> (i32, i32) {
    %c0_i32 = arith.constant 0 : i32
    %c0_i32_0 = arith.constant 0 : i32
    %c0_i32_1 = arith.constant 0 : i32
    return %c0_i32, %c0_i32_0 : i32, i32
  }
  func.func @transform_7(%arg0: i32) -> (i32, i32) {
    %c0_i32 = arith.constant 0 : i32
    %c0_i32_0 = arith.constant 0 : i32
    %c0_i32_1 = arith.constant 0 : i32
    return %c0_i32, %c0_i32_0 : i32, i32
  }
  func.func @transform_8(%arg0: i32) -> (i32, i32) {
    %c0_i32 = arith.constant 0 : i32
    %c0_i32_0 = arith.constant 0 : i32
    %c0_i32_1 = arith.constant 0 : i32
    return %c0_i32, %c0_i32_0 : i32, i32
  }
  func.func @transform_9(%arg0: i32) -> (i32, i32) {
    %c0_i32 = arith.constant 0 : i32
    %c0_i32_0 = arith.constant 0 : i32
    %c0_i32_1 = arith.constant 0 : i32
    return %c0_i32, %c0_i32_0 : i32, i32
  }
  func.func @transform_10(%arg0: i32) -> (i32, i32) {
    %c0_i32 = arith.constant 0 : i32
    %c0_i32_0 = arith.constant 0 : i32
    %c0_i32_1 = arith.constant 0 : i32
    return %c0_i32, %c0_i32_0 : i32, i32
  }
  func.func @transform_11(%arg0: i32) -> (i32, i32) {
    %c0_i32 = arith.constant 0 : i32
    %c0_i32_0 = arith.constant 0 : i32
    return %arg0, %c0_i32 : i32, i32
  }
}

</mosaic_0001>

<llo_original>
// kernel: tpu_custom_call.1
$region0: #{tpu_custom_call.1}
  #allocation0 [shape = 'u32[]', space=smem, size = 0x4, offset = 0x4, fixed_abs, tag = 'smem constant byte address 0x4 - core index']
  #allocation1 [shape = 'u32[144,128]{1,0:T(1,128)}', space=vmem, size = 0x12000, scoped, tag = 'internal scratch']
  %s0 = inlined_call_operand.vmem [shape: f32[16,32], index: 0, kind: input, shape index: {}]
  %s1 = inlined_call_operand.vmem [shape: f32[32,64], index: 1, kind: input, shape index: {}]
  %s2 = inlined_call_operand.vmem [shape: f32[1,64], index: 2, kind: input, shape index: {}]
  %s3 = inlined_call_operand.vmem [shape: f32[64,32], index: 3, kind: input, shape index: {}]
  %s4 = inlined_call_operand.vmem [shape: f32[1,32], index: 4, kind: input, shape index: {}]
  %s5 = inlined_call_operand.vmem [shape: f32[32,32], index: 5, kind: input, shape index: {}]
  %s6 = inlined_call_operand.vmem [shape: f32[1,32], index: 6, kind: input, shape index: {}]
  %s7 = inlined_call_operand.vmem [shape: f32[32,3], index: 7, kind: input, shape index: {}]
  %s8 = inlined_call_operand.vmem [shape: f32[1,3], index: 8, kind: input, shape index: {}]
  %s9 = inlined_call_operand.vmem [shape: f32[1,32], index: 9, kind: input, shape index: {}]
  %s10 = inlined_call_operand.vmem [shape: f32[1,32], index: 10, kind: input, shape index: {}]
  %s11 = inlined_call_operand.vmem [shape: f32[16,3], index: 11, kind: output, shape index: {}]
  %s12 = sld [smem:[#allocation0]]
  $region54: #{tpu_custom_call.1} parent=0
    _
  %s14 = ssub.s32 1, %s12
  %s15 = scalar_select 0, %s14, %s12
  // Predicated region
  $region2: #{tpu_custom_call.1} parent=0 // pred_check
    _
  $region3: #{tpu_custom_call.1} parent=0 // pred_check_branch
    %17 = sbr.rel (0) target = $region5
  $region4: #{tpu_custom_call.1} parent=0 // pred_region
    _
  $region5: #{tpu_custom_call.1} parent=0 // pred_fallthru
    _
  // Predicated region
  $region6: #{tpu_custom_call.1} parent=0 // pred_check
    _
  $region7: #{tpu_custom_call.1} parent=0 // pred_check_branch
    %19 = sbr.rel (0) target = $region9
  $region8: #{tpu_custom_call.1} parent=0 // pred_region
    _
  $region9: #{tpu_custom_call.1} parent=0 // pred_fallthru
    _
  // Predicated region
  $region10: #{tpu_custom_call.1} parent=0 // pred_check
    _
  $region11: #{tpu_custom_call.1} parent=0 // pred_check_branch
    %21 = sbr.rel (0) target = $region13
  $region12: #{tpu_custom_call.1} parent=0 // pred_region
    _
  $region13: #{tpu_custom_call.1} parent=0 // pred_fallthru
    _
  // Predicated region
  $region14: #{tpu_custom_call.1} parent=0 // pred_check
    _
  $region15: #{tpu_custom_call.1} parent=0 // pred_check_branch
    %23 = sbr.rel (0) target = $region17
  $region16: #{tpu_custom_call.1} parent=0 // pred_region
    _
  $region17: #{tpu_custom_call.1} parent=0 // pred_fallthru
    _
  // Predicated region
  $region18: #{tpu_custom_call.1} parent=0 // pred_check
    _
  $region19: #{tpu_custom_call.1} parent=0 // pred_check_branch
    %25 = sbr.rel (0) target = $region21
  $region20: #{tpu_custom_call.1} parent=0 // pred_region
    _
  $region21: #{tpu_custom_call.1} parent=0 // pred_fallthru
    _
  // Predicated region
  $region22: #{tpu_custom_call.1} parent=0 // pred_check
    _
  $region23: #{tpu_custom_call.1} parent=0 // pred_check_branch
    %27 = sbr.rel (0) target = $region25
  $region24: #{tpu_custom_call.1} parent=0 // pred_region
    _
  $region25: #{tpu_custom_call.1} parent=0 // pred_fallthru
    _
  // Predicated region
  $region26: #{tpu_custom_call.1} parent=0 // pred_check
    _
  $region27: #{tpu_custom_call.1} parent=0 // pred_check_branch
    %29 = sbr.rel (0) target = $region29
  $region28: #{tpu_custom_call.1} parent=0 // pred_region
    _
  $region29: #{tpu_custom_call.1} parent=0 // pred_fallthru
    _
  // Predicated region
  $region30: #{tpu_custom_call.1} parent=0 // pred_check
    _
  $region31: #{tpu_custom_call.1} parent=0 // pred_check_branch
    %31 = sbr.rel (0) target = $region33
  $region32: #{tpu_custom_call.1} parent=0 // pred_region
    _
  $region33: #{tpu_custom_call.1} parent=0 // pred_fallthru
    _
  // Predicated region
  $region34: #{tpu_custom_call.1} parent=0 // pred_check
    _
  $region35: #{tpu_custom_call.1} parent=0 // pred_check_branch
    %33 = sbr.rel (0) target = $region37
  $region36: #{tpu_custom_call.1} parent=0 // pred_region
    _
  $region37: #{tpu_custom_call.1} parent=0 // pred_fallthru
    _
  // Predicated region
  $region38: #{tpu_custom_call.1} parent=0 // pred_check
    _
  $region39: #{tpu_custom_call.1} parent=0 // pred_check_branch
    %35 = sbr.rel (0) target = $region41
  $region40: #{tpu_custom_call.1} parent=0 // pred_region
    _
  $region41: #{tpu_custom_call.1} parent=0 // pred_fallthru
    _
  // Predicated region
  $region42: #{tpu_custom_call.1} parent=0 // pred_check
    _
  $region43: #{tpu_custom_call.1} parent=0 // pred_check_branch
    %37 = sbr.rel (0) target = $region45
  $region44: #{tpu_custom_call.1} parent=0 // pred_region
    _
  $region45: #{tpu_custom_call.1} parent=0 // pred_fallthru
    _
  %v38 = vld [vmem:[%s0] sm:$0xff]
  %v39 = vld [vmem:[%s0 + $0x8] sm:$0xff]
  %v40 = vld [vmem:[%s1] sm:$0xff]
  %v41 = vld [vmem:[%s1 + $0x8] sm:$0xff]
  %v42 = vld [vmem:[%s1 + $0x10] sm:$0xff]
  %v43 = vld [vmem:[%s1 + $0x18] sm:$0xff]
  %v44 = vld [vmem:[%s2] sm:$0x1]
  %v46 = vlaneseq
  %v47 = vshrl.u32 %v46, 7
  %v48 = vsub.s32 0, %v47
  %v49 = vrot.slane %v44, %v48
  %vm51 = vcmask 261120
  %v53 = vsel %vm51, %v38, 0
  %v56 = vsel %vm51, %v39, 0
  %58 = vmatprep.subr.mxu0 0.0
  %59 = vmatpush1.msra.mxu0 0.0
  %60 = vmatprep.subr.mxu0 0.0
  %61 = vmatpush1.msra.mxu0 0.0
  %62 = vmatprep.subr.mxu0 0.0
  %63 = vmatpush1.msra.mxu0 0.0
  %64 = vmatprep.subr.mxu0 0.0
  %65 = vmatpush1.msra.mxu0 0.0
  %66 = vmatprep.subr.mxu0 0.0
  %67 = vmatpush1.msra.mxu0 0.0
  %68 = vmatprep.subr.mxu0 0.0
  %69 = vmatpush1.msra.mxu0 0.0
  %70 = vmatprep.subr.mxu0 0.0
  %71 = vmatpush1.msra.mxu0 0.0
  %72 = vmatprep.subr.mxu0 0.0
  %73 = vmatpush1.msra.mxu0 0.0
  %74 = vmatprep.subr.mxu0 0.0
  %75 = vmatpush1.msra.mxu0 0.0
  %76 = vmatprep.subr.mxu0 0.0
  %77 = vmatpush1.msra.mxu0 0.0
  %78 = vmatprep.subr.mxu0 0.0
  %79 = vmatpush1.msra.mxu0 0.0
  %80 = vmatprep.subr.mxu0 0.0
  %81 = vmatpush1.msra.mxu0 0.0
  %82 = vmatprep.subr.mxu0 0.0
  %83 = vmatpush1.msra.mxu0 %v43
  %84 = vmatprep.subr.mxu0 0.0
  %85 = vmatpush1.msra.mxu0 %v42
  %86 = vmatprep.subr.mxu0 0.0
  %87 = vmatpush1.msra.mxu0 %v41
  %88 = vmatprep.subr.mxu0 0.0
  %89 = vmatpush1.msra.mxu0 %v40
  %90 = vmatprep.subr.mxu0 0.0
  %91 = vmatpush2.msra.mxu0 0.0
  %92 = vmatprep.subr.mxu0 0.0
  %93 = vmatpush2.msra.mxu0 0.0
  %94 = vmatprep.subr.mxu0 0.0
  %95 = vmatpush2.msra.mxu0 0.0
  %96 = vmatprep.subr.mxu0 0.0
  %97 = vmatpush2.msra.mxu0 0.0
  %98 = vmatprep.subr.mxu0 0.0
  %99 = vmatpush2.msra.mxu0 0.0
  %100 = vmatprep.subr.mxu0 0.0
  %101 = vmatpush2.msra.mxu0 0.0
  %102 = vmatprep.subr.mxu0 0.0
  %103 = vmatpush2.msra.mxu0 0.0
  %104 = vmatprep.subr.mxu0 0.0
  %105 = vmatpush2.msra.mxu0 0.0
  %106 = vmatprep.subr.mxu0 0.0
  %107 = vmatpush2.msra.mxu0 0.0
  %108 = vmatprep.subr.mxu0 0.0
  %109 = vmatpush2.msra.mxu0 0.0
  %110 = vmatprep.subr.mxu0 0.0
  %111 = vmatpush2.msra.mxu0 0.0
  %112 = vmatprep.subr.mxu0 0.0
  %113 = vmatpush2.msra.mxu0 0.0
  %114 = vmatprep.subr.mxu0 0.0
  %115 = vmatpush2.msra.mxu0 0.0
  %116 = vmatprep.subr.mxu0 0.0
  %117 = vmatpush2.msra.mxu0 0.0
  %118 = vmatprep.subr.mxu0 0.0
  %119 = vmatpush2.msra.mxu0 0.0
  %120 = vmatprep.subr.mxu0 0.0
  %121 = vmatpush2.msra.mxu0 0.0
  %122 = vmatprep.mubr.f32.mxu0 0.0
  %123 = vmatmul.mubr.f32.gmra.mxu0 %v53
  %v124 = vpop.f32.mrf.mxu0
  %v125 = vadd.f32 %v49, %v124
  %v126 = vpop.f32.mrf.mxu0
  %127 = vmatprep.mubr.f32.mxu0 0.0
  %128 = vmatmul.mubr.f32.gmra.mxu0 %v56
  %v129 = vpop.f32.mrf.mxu0
  %v130 = vadd.f32 %v49, %v129
  %v131 = vpop.f32.mrf.mxu0
  %132 = vdwg.mxu0
  %v133 = vtanh.pop %v125
  %v134 = vtanh.pop %v130
  %v135 = vld [vmem:[%s3] sm:$0xff]
  %v136 = vld [vmem:[%s3 + $0x8] sm:$0xff]
  %v137 = vld [vmem:[%s3 + $0x10] sm:$0xff]
  %v138 = vld [vmem:[%s3 + $0x18] sm:$0xff]
  %v139 = vld [vmem:[%s3 + $0x20] sm:$0xff]
  %v140 = vld [vmem:[%s3 + $0x28] sm:$0xff]
  %v141 = vld [vmem:[%s3 + $0x30] sm:$0xff]
  %v142 = vld [vmem:[%s3 + $0x38] sm:$0xff]
  %v143 = vld [vmem:[%s4] sm:$0x1]
  %v145 = vlaneseq
  %v146 = vshrl.u32 %v145, 7
  %v147 = vsub.s32 0, %v146
  %v148 = vrot.slane %v143, %v147
  %vm150 = vcmask 523264
  %v152 = vsel %vm150, %v133, 0
  %v155 = vsel %vm150, %v134, 0
  %157 = vmatprep.subr.mxu0 0.0
  %158 = vmatpush1.msra.mxu0 0.0
  %159 = vmatprep.subr.mxu0 0.0
  %160 = vmatpush1.msra.mxu0 0.0
  %161 = vmatprep.subr.mxu0 0.0
  %162 = vmatpush1.msra.mxu0 0.0
  %163 = vmatprep.subr.mxu0 0.0
  %164 = vmatpush1.msra.mxu0 0.0
  %165 = vmatprep.subr.mxu0 0.0
  %166 = vmatpush1.msra.mxu0 0.0
  %167 = vmatprep.subr.mxu0 0.0
  %168 = vmatpush1.msra.mxu0 0.0
  %169 = vmatprep.subr.mxu0 0.0
  %170 = vmatpush1.msra.mxu0 0.0
  %171 = vmatprep.subr.mxu0 0.0
  %172 = vmatpush1.msra.mxu0 0.0
  %173 = vmatprep.subr.mxu0 0.0
  %174 = vmatpush1.msra.mxu0 %v142
  %175 = vmatprep.subr.mxu0 0.0
  %176 = vmatpush1.msra.mxu0 %v141
  %177 = vmatprep.subr.mxu0 0.0
  %178 = vmatpush1.msra.mxu0 %v140
  %179 = vmatprep.subr.mxu0 0.0
  %180 = vmatpush1.msra.mxu0 %v139
  %181 = vmatprep.subr.mxu0 0.0
  %182 = vmatpush1.msra.mxu0 %v138
  %183 = vmatprep.subr.mxu0 0.0
  %184 = vmatpush1.msra.mxu0 %v137
  %185 = vmatprep.subr.mxu0 0.0
  %186 = vmatpush1.msra.mxu0 %v136
  %187 = vmatprep.subr.mxu0 0.0
  %188 = vmatpush1.msra.mxu0 %v135
  %189 = vmatprep.subr.mxu0 0.0
  %190 = vmatpush2.msra.mxu0 0.0
  %191 = vmatprep.subr.mxu0 0.0
  %192 = vmatpush2.msra.mxu0 0.0
  %193 = vmatprep.subr.mxu0 0.0
  %194 = vmatpush2.msra.mxu0 0.0
  %195 = vmatprep.subr.mxu0 0.0
  %196 = vmatpush2.msra.mxu0 0.0
  %197 = vmatprep.subr.mxu0 0.0
  %198 = vmatpush2.msra.mxu0 0.0
  %199 = vmatprep.subr.mxu0 0.0
  %200 = vmatpush2.msra.mxu0 0.0
  %201 = vmatprep.subr.mxu0 0.0
  %202 = vmatpush2.msra.mxu0 0.0
  %203 = vmatprep.subr.mxu0 0.0
  %204 = vmatpush2.msra.mxu0 0.0
  %205 = vmatprep.subr.mxu0 0.0
  %206 = vmatpush2.msra.mxu0 0.0
  %207 = vmatprep.subr.mxu0 0.0
  %208 = vmatpush2.msra.mxu0 0.0
  %209 = vmatprep.subr.mxu0 0.0
  %210 = vmatpush2.msra.mxu0 0.0
  %211 = vmatprep.subr.mxu0 0.0
  %212 = vmatpush2.msra.mxu0 0.0
  %213 = vmatprep.subr.mxu0 0.0
  %214 = vmatpush2.msra.mxu0 0.0
  %215 = vmatprep.subr.mxu0 0.0
  %216 = vmatpush2.msra.mxu0 0.0
  %217 = vmatprep.subr.mxu0 0.0
  %218 = vmatpush2.msra.mxu0 0.0
  %219 = vmatprep.subr.mxu0 0.0
  %220 = vmatpush2.msra.mxu0 0.0
  %221 = vmatprep.mubr.f32.mxu0 0.0
  %222 = vmatmul.mubr.f32.gmra.mxu0 %v152
  %v223 = vpop.f32.mrf.mxu0
  %v224 = vadd.f32 %v148, %v223
  %v225 = vpop.f32.mrf.mxu0
  %226 = vmatprep.mubr.f32.mxu0 0.0
  %227 = vmatmul.mubr.f32.gmra.mxu0 %v155
  %v228 = vpop.f32.mrf.mxu0
  %v229 = vadd.f32 %v148, %v228
  %v230 = vpop.f32.mrf.mxu0
  %231 = vdwg.mxu0
  %v232 = vtanh.pop %v224
  %v233 = vtanh.pop %v229
  %v234 = vadd.f32 %v38, %v232
  %v235 = vadd.f32 %v39, %v233
  %v236 = vsel %vm51, %v234, 0.0
  %237 = vadd.xlane.f32.xlu0 %v236
  %v238 = vpop.xlane.xlu0 %237
  %v239 = vsel %vm51, %v235, 0.0
  %240 = vadd.xlane.f32.xlu0 %v239
  %v241 = vpop.xlane.xlu0 %240
  %v242 = vrcp.pop 32.0
  %v243 = vmul.f32 %v238, %v242
  %v244 = vmul.f32 %v241, %v242
  %v245 = vmul.f32 %v234, %v234
  %v246 = vmul.f32 %v235, %v235
  %v247 = vsel %vm51, %v245, 0.0
  %248 = vadd.xlane.f32.xlu0 %v247
  %v249 = vpop.xlane.xlu0 %248
  %v250 = vsel %vm51, %v246, 0.0
  %251 = vadd.xlane.f32.xlu0 %v250
  %v252 = vpop.xlane.xlu0 %251
  %v253 = vmul.f32 %v249, %v242
  %v254 = vmul.f32 %v252, %v242
  %v255 = vmul.f32 %v243, %v243
  %v256 = vmul.f32 %v244, %v244
  %v257 = vsub.f32 %v253, %v255
  %v258 = vsub.f32 %v254, %v256
  %v259 = vmax.f32 %v257, 0.0
  %v260 = vmax.f32 %v258, 0.0
  %v261 = vsub.f32 %v234, %v243
  %v262 = vsub.f32 %v235, %v244
  %v263 = vadd.f32 %v259, 1e-05
  %v264 = vadd.f32 %v260, 1e-05
  %v265 = vrsqrt.pop %v263
  %v266 = vrsqrt.pop %v264
  %v267 = vmul.f32 %v261, %v265
  %v268 = vmul.f32 %v262, %v266
  %v269 = vld [vmem:[%s9] sm:$0x1]
  %v271 = vlaneseq
  %v272 = vshrl.u32 %v271, 7
  %v273 = vsub.s32 0, %v272
  %v274 = vrot.slane %v269, %v273
  %v276 = vmul.f32 %v267, %v274
  %v277 = vmul.f32 %v268, %v274
  %v278 = vld [vmem:[%s10] sm:$0x1]
  %v280 = vlaneseq
  %v281 = vshrl.u32 %v280, 7
  %v282 = vsub.s32 0, %v281
  %v283 = vrot.slane %v278, %v282
  %v285 = vadd.f32 %v276, %v283
  %v286 = vadd.f32 %v277, %v283
  %v287 = vld [vmem:[%s5] sm:$0xff]
  %v288 = vld [vmem:[%s5 + $0x8] sm:$0xff]
  %v289 = vld [vmem:[%s5 + $0x10] sm:$0xff]
  %v290 = vld [vmem:[%s5 + $0x18] sm:$0xff]
  %v291 = vld [vmem:[%s6] sm:$0x1]
  %v293 = vlaneseq
  %v294 = vshrl.u32 %v293, 7
  %v295 = vsub.s32 0, %v294
  %v296 = vrot.slane %v291, %v295
  %v299 = vsel %vm51, %v285, 0
  %v302 = vsel %vm51, %v286, 0
  %304 = vmatprep.subr.mxu0 0.0
  %305 = vmatpush1.msra.mxu0 0.0
  %306 = vmatprep.subr.mxu0 0.0
  %307 = vmatpush1.msra.mxu0 0.0
  %308 = vmatprep.subr.mxu0 0.0
  %309 = vmatpush1.msra.mxu0 0.0
  %310 = vmatprep.subr.mxu0 0.0
  %311 = vmatpush1.msra.mxu0 0.0
  %312 = vmatprep.subr.mxu0 0.0
  %313 = vmatpush1.msra.mxu0 0.0
  %314 = vmatprep.subr.mxu0 0.0
  %315 = vmatpush1.msra.mxu0 0.0
  %316 = vmatprep.subr.mxu0 0.0
  %317 = vmatpush1.msra.mxu0 0.0
  %318 = vmatprep.subr.mxu0 0.0
  %319 = vmatpush1.msra.mxu0 0.0
  %320 = vmatprep.subr.mxu0 0.0
  %321 = vmatpush1.msra.mxu0 0.0
  %322 = vmatprep.subr.mxu0 0.0
  %323 = vmatpush1.msra.mxu0 0.0
  %324 = vmatprep.subr.mxu0 0.0
  %325 = vmatpush1.msra.mxu0 0.0
  %326 = vmatprep.subr.mxu0 0.0
  %327 = vmatpush1.msra.mxu0 0.0
  %328 = vmatprep.subr.mxu0 0.0
  %329 = vmatpush1.msra.mxu0 %v290
  %330 = vmatprep.subr.mxu0 0.0
  %331 = vmatpush1.msra.mxu0 %v289
  %332 = vmatprep.subr.mxu0 0.0
  %333 = vmatpush1.msra.mxu0 %v288
  %334 = vmatprep.subr.mxu0 0.0
  %335 = vmatpush1.msra.mxu0 %v287
  %336 = vmatprep.subr.mxu0 0.0
  %337 = vmatpush2.msra.mxu0 0.0
  %338 = vmatprep.subr.mxu0 0.0
  %339 = vmatpush2.msra.mxu0 0.0
  %340 = vmatprep.subr.mxu0 0.0
  %341 = vmatpush2.msra.mxu0 0.0
  %342 = vmatprep.subr.mxu0 0.0
  %343 = vmatpush2.msra.mxu0 0.0
  %344 = vmatprep.subr.mxu0 0.0
  %345 = vmatpush2.msra.mxu0 0.0
  %346 = vmatprep.subr.mxu0 0.0
  %347 = vmatpush2.msra.mxu0 0.0
  %348 = vmatprep.subr.mxu0 0.0
  %349 = vmatpush2.msra.mxu0 0.0
  %350 = vmatprep.subr.mxu0 0.0
  %351 = vmatpush2.msra.mxu0 0.0
  %352 = vmatprep.subr.mxu0 0.0
  %353 = vmatpush2.msra.mxu0 0.0
  %354 = vmatprep.subr.mxu0 0.0
  %355 = vmatpush2.msra.mxu0 0.0
  %356 = vmatprep.subr.mxu0 0.0
  %357 = vmatpush2.msra.mxu0 0.0
  %358 = vmatprep.subr.mxu0 0.0
  %359 = vmatpush2.msra.mxu0 0.0
  %360 = vmatprep.subr.mxu0 0.0
  %361 = vmatpush2.msra.mxu0 0.0
  %362 = vmatprep.subr.mxu0 0.0
  %363 = vmatpush2.msra.mxu0 0.0
  %364 = vmatprep.subr.mxu0 0.0
  %365 = vmatpush2.msra.mxu0 0.0
  %366 = vmatprep.subr.mxu0 0.0
  %367 = vmatpush2.msra.mxu0 0.0
  %368 = vmatprep.mubr.f32.mxu0 0.0
  %369 = vmatmul.mubr.f32.gmra.mxu0 %v299
  %v370 = vpop.f32.mrf.mxu0
  %v371 = vadd.f32 %v296, %v370
  %v372 = vpop.f32.mrf.mxu0
  %373 = vmatprep.mubr.f32.mxu0 0.0
  %374 = vmatmul.mubr.f32.gmra.mxu0 %v302
  %v375 = vpop.f32.mrf.mxu0
  %v376 = vadd.f32 %v296, %v375
  %v377 = vpop.f32.mrf.mxu0
  %378 = vdwg.mxu0
  %vm379 = vcmp.gt.f32.partialorder %v371, 0.0
  %vm380 = vcmp.gt.f32.partialorder %v376, 0.0
  %v381 = vmul.f32 %v371, 0.1
  %v382 = vmul.f32 %v376, 0.1
  %v383 = vsel %vm379, %v371, %v381
  %v384 = vsel %vm380, %v376, %v382
  %v385 = vld [vmem:[%s7] sm:$0xff]
  %v386 = vld [vmem:[%s7 + $0x8] sm:$0xff]
  %v387 = vld [vmem:[%s7 + $0x10] sm:$0xff]
  %v388 = vld [vmem:[%s7 + $0x18] sm:$0xff]
  %v389 = vld [vmem:[%s8] sm:$0x1]
  %v391 = vlaneseq
  %v392 = vshrl.u32 %v391, 7
  %v393 = vsub.s32 0, %v392
  %v394 = vrot.slane %v389, %v393
  %v397 = vsel %vm51, %v383, 0
  %v400 = vsel %vm51, %v384, 0
  %402 = vmatprep.subr.mxu0 0.0
  %403 = vmatpush1.msra.mxu0 0.0
  %404 = vmatprep.subr.mxu0 0.0
  %405 = vmatpush1.msra.mxu0 0.0
  %406 = vmatprep.subr.mxu0 0.0
  %407 = vmatpush1.msra.mxu0 0.0
  %408 = vmatprep.subr.mxu0 0.0
  %409 = vmatpush1.msra.mxu0 0.0
  %410 = vmatprep.subr.mxu0 0.0
  %411 = vmatpush1.msra.mxu0 0.0
  %412 = vmatprep.subr.mxu0 0.0
  %413 = vmatpush1.msra.mxu0 0.0
  %414 = vmatprep.subr.mxu0 0.0
  %415 = vmatpush1.msra.mxu0 0.0
  %416 = vmatprep.subr.mxu0 0.0
  %417 = vmatpush1.msra.mxu0 0.0
  %418 = vmatprep.subr.mxu0 0.0
  %419 = vmatpush1.msra.mxu0 0.0
  %420 = vmatprep.subr.mxu0 0.0
  %421 = vmatpush1.msra.mxu0 0.0
  %422 = vmatprep.subr.mxu0 0.0
  %423 = vmatpush1.msra.mxu0 0.0
  %424 = vmatprep.subr.mxu0 0.0
  %425 = vmatpush1.msra.mxu0 0.0
  %426 = vmatprep.subr.mxu0 0.0
  %427 = vmatpush1.msra.mxu0 %v388
  %428 = vmatprep.subr.mxu0 0.0
  %429 = vmatpush1.msra.mxu0 %v387
  %430 = vmatprep.subr.mxu0 0.0
  %431 = vmatpush1.msra.mxu0 %v386
  %432 = vmatprep.subr.mxu0 0.0
  %433 = vmatpush1.msra.mxu0 %v385
  %434 = vmatprep.subr.mxu0 0.0
  %435 = vmatpush2.msra.mxu0 0.0
  %436 = vmatprep.subr.mxu0 0.0
  %437 = vmatpush2.msra.mxu0 0.0
  %438 = vmatprep.subr.mxu0 0.0
  %439 = vmatpush2.msra.mxu0 0.0
  %440 = vmatprep.subr.mxu0 0.0
  %441 = vmatpush2.msra.mxu0 0.0
  %442 = vmatprep.subr.mxu0 0.0
  %443 = vmatpush2.msra.mxu0 0.0
  %444 = vmatprep.subr.mxu0 0.0
  %445 = vmatpush2.msra.mxu0 0.0
  %446 = vmatprep.subr.mxu0 0.0
  %447 = vmatpush2.msra.mxu0 0.0
  %448 = vmatprep.subr.mxu0 0.0
  %449 = vmatpush2.msra.mxu0 0.0
  %450 = vmatprep.subr.mxu0 0.0
  %451 = vmatpush2.msra.mxu0 0.0
  %452 = vmatprep.subr.mxu0 0.0
  %453 = vmatpush2.msra.mxu0 0.0
  %454 = vmatprep.subr.mxu0 0.0
  %455 = vmatpush2.msra.mxu0 0.0
  %456 = vmatprep.subr.mxu0 0.0
  %457 = vmatpush2.msra.mxu0 0.0
  %458 = vmatprep.subr.mxu0 0.0
  %459 = vmatpush2.msra.mxu0 0.0
  %460 = vmatprep.subr.mxu0 0.0
  %461 = vmatpush2.msra.mxu0 0.0
  %462 = vmatprep.subr.mxu0 0.0
  %463 = vmatpush2.msra.mxu0 0.0
  %464 = vmatprep.subr.mxu0 0.0
  %465 = vmatpush2.msra.mxu0 0.0
  %466 = vmatprep.mubr.f32.mxu0 0.0
  %467 = vmatmul.mubr.f32.gmra.mxu0 %v397
  %v468 = vpop.f32.mrf.mxu0
  %v469 = vadd.f32 %v394, %v468
  %v470 = vpop.f32.mrf.mxu0
  %471 = vmatprep.mubr.f32.mxu0 0.0
  %472 = vmatmul.mubr.f32.gmra.mxu0 %v400
  %v473 = vpop.f32.mrf.mxu0
  %v474 = vadd.f32 %v394, %v473
  %v475 = vpop.f32.mrf.mxu0
  %476 = vdwg.mxu0
  %vm477 = vcmask 23552
  %478 = vst.msk [vmem:[%s11] sm:$0xff] %vm477, %v469
  %479 = vst.msk [vmem:[%s11 + $0x8] sm:$0xff] %vm477, %v474
  // Predicated region
  $region46: #{tpu_custom_call.1} parent=0 // pred_check
    _
  $region47: #{tpu_custom_call.1} parent=0 // pred_check_branch
    %481 = sbr.rel (0) target = $region49
  $region48: #{tpu_custom_call.1} parent=0 // pred_region
    _
  $region49: #{tpu_custom_call.1} parent=0 // pred_fallthru
    _
  // Predicated region
  $region50: #{tpu_custom_call.1} parent=0 // pred_check
    _
  $region51: #{tpu_custom_call.1} parent=0 // pred_check_branch
    %483 = sbr.rel (0) target = $region53
  $region52: #{tpu_custom_call.1} parent=0 // pred_region
    _
  $region53: #{tpu_custom_call.1} parent=0 // pred_fallthru
    _

</llo_original>
